<compile_context>
chip_gen: v5e
topology: v5e:2x2
jax: 0.10.0
libtpu: 0.0.40
codegen_flags: <defaults>
</compile_context>

<pallas_src>
import jax
import jax.numpy as jnp
from jax import lax
from jax.experimental import pallas as pl
from jax.experimental.pallas import tpu as pltpu


def critic_kernel(x_ref, w1_ref, b1_ref, w2_ref, b2_ref, out_ref):
    # fc1: (Bt, obs) @ (obs, hid) on the MXU, f32 accumulation.
    h = jnp.dot(x_ref[...], w1_ref[...], preferred_element_type=jnp.float32)
    h = jnp.maximum(h + b1_ref[...], 0.0)                     # bias + ReLU (VPU, f32)
    # Output head: (1, hid) x (Bt, hid) contracted over hid -> lane-dense (1, Bt).
    v = lax.dot_general(w2_ref[...], h, (((1,), (1,)), ((), ())),
                        preferred_element_type=jnp.float32)
    out_ref[...] = (v + b2_ref[0]).astype(out_ref.dtype)      # b2: SMEM scalar


def critic_net(x, w1, b1, w2, b2, *, vmem_limit_bytes=48 * 1024 * 1024):
    """x: (B, obs) f32 -> (B, 1) f32.

    w1: (obs, hid), b1: (hid,), w2: (hid, 1) or (hid,), b2: (1,) -- PyTorch
    nn.Linear semantics with weights already transposed to (in, out).
    """
    B, obs = x.shape
    hid = w1.shape[1]

    # ---- Batch tile from a VMEM budget -------------------------------------
    # Per-row f32 bytes: x double-buffer (lane-padded to >=128 lanes when
    # obs < 128) + fc1 intermediate (+ relu copy) + lane-dense out rows.
    lane_obs = max(obs, 128)
    per_row = (2 * lane_obs + 2 * hid + 4) * 4
    resident = (obs * hid + 4 * hid) * 4          # W1 + b1 + w2 (pessimistic, dbl-buffered)
    budget = int(vmem_limit_bytes * 0.7)          # headroom for compiler scratch
    bt_cap = max(128, (budget - resident) // per_row)
    if B <= bt_cap:
        Bt = B                                    # whole batch in one grid step
    else:
        Bt = (bt_cap // 128) * 128                # lane-dense out tiles, sublane-aligned x tiles
    grid_b = pl.cdiv(B, Bt)                       # ragged last block masked by Pallas (no jnp.pad)

    # Tiny parameter reshapes only (no per-element HBM passes over x).
    b1_2d = b1.reshape(1, hid).astype(jnp.float32)
    w2_row = w2.reshape(1, hid).astype(jnp.float32)   # lane-dense weight row for the head
    b2_s = b2.reshape(1).astype(jnp.float32)          # scalar -> SMEM

    out = pl.pallas_call(
        critic_kernel,
        out_shape=jax.ShapeDtypeStruct((1, B), jnp.float32),
        grid=(grid_b,),
        in_specs=[
            pl.BlockSpec((Bt, obs), lambda i: (i, 0)),           # x tile: pipelined f32 reads
            pl.BlockSpec((obs, hid), lambda i: (0, 0)),          # W1 resident
            pl.BlockSpec((1, hid), lambda i: (0, 0)),            # b1 resident
            pl.BlockSpec((1, hid), lambda i: (0, 0)),            # w2 row resident
            pl.BlockSpec(memory_space=pltpu.MemorySpace.SMEM),   # b2 scalar in SMEM
        ],
        out_specs=pl.BlockSpec((1, Bt), lambda i: (0, i)),       # lane-dense output rows
        compiler_params=pltpu.CompilerParams(
            dimension_semantics=("parallel",),    # v7x: batch tiles shard across both TCs
            vmem_limit_bytes=vmem_limit_bytes,
        ),
    )(x.astype(jnp.float32), w1.astype(jnp.float32), b1_2d, w2_row, b2_s)

    return out.reshape(B, 1)


def reference(x, w1, b1, w2, b2):
    h = jnp.maximum(jnp.dot(x, w1) + b1, 0.0)
    return jnp.dot(h, w2.reshape(-1, 1)) + b2


if __name__ == "__main__":
    key = jax.random.PRNGKey(0)
    B, obs_size, hid_size = 8, 16, 128

    k_x, k_w1, k_b1, k_w2, k_b2 = jax.random.split(key, 5)
    # Deterministic parameter init (synthetic, PyTorch-Linear-like uniform ranges).
    bound1 = 1.0 / jnp.sqrt(obs_size)
    bound2 = 1.0 / jnp.sqrt(hid_size)
    w1 = jax.random.uniform(k_w1, (obs_size, hid_size), jnp.float32, -bound1, bound1)
    b1 = jax.random.uniform(k_b1, (hid_size,), jnp.float32, -bound1, bound1)
    w2 = jax.random.uniform(k_w2, (hid_size, 1), jnp.float32, -bound2, bound2)
    b2 = jax.random.uniform(k_b2, (1,), jnp.float32, -bound2, bound2)

    x = jax.random.normal(k_x, (B, obs_size), jnp.float32)

    out = critic_net(x, w1, b1, w2, b2)
    jax.block_until_ready(out)

    ref = reference(x, w1, b1, w2, b2)
    assert out.shape == (B, 1)
    assert jnp.allclose(out, ref, atol=1e-2, rtol=1e-2)
    print("KERNEL_OK")
</pallas_src>

<mosaic_0001>
module attributes {stable_mosaic.version = 11 : i64} {
  func.func @critic_kernel(%arg0: i32, %arg1: memref<8x16xf32, #tpu.memory_space<vmem>>, %arg2: memref<16x128xf32, #tpu.memory_space<vmem>>, %arg3: memref<1x128xf32, #tpu.memory_space<vmem>>, %arg4: memref<1x128xf32, #tpu.memory_space<vmem>>, %arg5: memref<1xf32, #tpu.memory_space<smem>>, %arg6: memref<1x8xf32, #tpu.memory_space<vmem>>) attributes {dimension_semantics = [#tpu.dimension_semantics<parallel>], iteration_bounds = array<i64: 1>, scalar_prefetch = 0 : i64, scratch_operands = 0 : i64, tpu.core_type = #tpu.core_type<tc>, window_params = [{transform_indices = @transform_0, window_bounds = array<i64: 8, 16>}, {pipeline_mode = #tpu.pipeline_mode<synchronous>, transform_indices = @transform_1, window_bounds = array<i64: 16, 128>}, {pipeline_mode = #tpu.pipeline_mode<synchronous>, transform_indices = @transform_2, window_bounds = array<i64: 1, 128>}, {pipeline_mode = #tpu.pipeline_mode<synchronous>, transform_indices = @transform_3, window_bounds = array<i64: 1, 128>}, {transform_indices = @transform_4, window_bounds = array<i64: 1>}, {transform_indices = @transform_5, window_bounds = array<i64: 1, 8>}]} {
    %c0 = arith.constant 0 : index
    %c0_0 = arith.constant 0 : index
    %0 = vector.load %arg1[%c0, %c0_0] : memref<8x16xf32, #tpu.memory_space<vmem>>, vector<8x16xf32>
    %c0_1 = arith.constant 0 : index
    %c0_2 = arith.constant 0 : index
    %1 = vector.load %arg2[%c0_1, %c0_2] : memref<16x128xf32, #tpu.memory_space<vmem>>, vector<16x128xf32>
    %cst = arith.constant dense<0.000000e+00> : vector<8x128xf32>
    %2 = tpu.matmul %0, %1, %cst {dimension_numbers = #tpu.dot_dimension_numbers<[1], [0], [0], [1], [0, 0, 1, 1], [], []>} : vector<8x16xf32>, vector<16x128xf32>, vector<8x128xf32> -> vector<8x128xf32>
    %c0_3 = arith.constant 0 : index
    %c0_4 = arith.constant 0 : index
    %3 = vector.load %arg3[%c0_3, %c0_4] : memref<1x128xf32, #tpu.memory_space<vmem>>, vector<1x128xf32>
    %4 = vector.broadcast %3 : vector<1x128xf32> to vector<8x128xf32>
    %5 = arith.addf %2, %4 : vector<8x128xf32>
    %cst_5 = arith.constant 0.000000e+00 : f32
    %6 = vector.broadcast %cst_5 : f32 to vector<8x128xf32>
    %7 = arith.maximumf %5, %6 : vector<8x128xf32>
    %c0_6 = arith.constant 0 : index
    %c0_7 = arith.constant 0 : index
    %8 = vector.load %arg4[%c0_6, %c0_7] : memref<1x128xf32, #tpu.memory_space<vmem>>, vector<1x128xf32>
    %cst_8 = arith.constant dense<0.000000e+00> : vector<1x8xf32>
    %9 = tpu.matmul %8, %7, %cst_8 {dimension_numbers = #tpu.dot_dimension_numbers<[1], [1], [0], [0], [0, 0, 1, 0], [], []>} : vector<1x128xf32>, vector<8x128xf32>, vector<1x8xf32> -> vector<1x8xf32>
    %c0_9 = arith.constant 0 : index
    %10 = memref.load %arg5[%c0_9] : memref<1xf32, #tpu.memory_space<smem>>
    %11 = vector.broadcast %10 : f32 to vector<1x8xf32>
    %12 = arith.addf %9, %11 : vector<1x8xf32>
    %c0_10 = arith.constant 0 : index
    %c0_11 = arith.constant 0 : index
    %13 = vector.load %arg6[%c0_10, %c0_11] : memref<1x8xf32, #tpu.memory_space<vmem>>, vector<1x8xf32>
    tpu.vector_store %arg6[%c0_10, %c0_11], %12 {strides = array<i32>} : memref<1x8xf32, #tpu.memory_space<vmem>>, vector<1x8xf32>,
    return
  }
  func.func @transform_0(%arg0: i32) -> (i32, i32) {
    %c0_i32 = arith.constant 0 : i32
    %c0_i32_0 = arith.constant 0 : i32
    return %arg0, %c0_i32 : i32, i32
  }
  func.func @transform_1(%arg0: i32) -> (i32, i32) {
    %c0_i32 = arith.constant 0 : i32
    %c0_i32_0 = arith.constant 0 : i32
    %c0_i32_1 = arith.constant 0 : i32
    return %c0_i32, %c0_i32_0 : i32, i32
  }
  func.func @transform_2(%arg0: i32) -> (i32, i32) {
    %c0_i32 = arith.constant 0 : i32
    %c0_i32_0 = arith.constant 0 : i32
    %c0_i32_1 = arith.constant 0 : i32
    return %c0_i32, %c0_i32_0 : i32, i32
  }
  func.func @transform_3(%arg0: i32) -> (i32, i32) {
    %c0_i32 = arith.constant 0 : i32
    %c0_i32_0 = arith.constant 0 : i32
    %c0_i32_1 = arith.constant 0 : i32
    return %c0_i32, %c0_i32_0 : i32, i32
  }
  func.func @transform_4(%arg0: i32) -> i32 {
    %c0_i32 = arith.constant 0 : i32
    %c0_i32_0 = arith.constant 0 : i32
    return %c0_i32 : i32
  }
  func.func @transform_5(%arg0: i32) -> (i32, i32) {
    %c0_i32 = arith.constant 0 : i32
    %c0_i32_0 = arith.constant 0 : i32
    return %c0_i32, %arg0 : i32, i32
  }
}

</mosaic_0001>

<llo_original>
// kernel: tpu_custom_call.1
$region0: #{tpu_custom_call.1}
  #allocation0 [shape = 'u32[]', space=smem, size = 0x4, offset = 0x4, fixed_abs, tag = 'smem constant byte address 0x4 - core index']
  #allocation1 [shape = 'u32[72,128]{1,0:T(1,128)}', space=vmem, size = 0x9000, scoped, tag = 'internal scratch']
  #allocation2 [shape = 'f32[1]{0:T(128)S(6)}', space=smem, size = 0x200, scoped, tag = 'scoped memory for tpu_custom_call.1']
  %s0 = inlined_call_operand.hbm [shape: f32[8,16], index: 0, kind: input, shape index: {}]
  %s1 = inlined_call_operand.hbm [shape: f32[16,128], index: 1, kind: input, shape index: {}]
  %s2 = inlined_call_operand.vmem [shape: f32[1,128], index: 2, kind: input, shape index: {}]
  %s3 = inlined_call_operand.vmem [shape: f32[1,128], index: 3, kind: input, shape index: {}]
  %s4 = inlined_call_operand.<no memory space> [shape: f32[1], index: 4, kind: input, shape index: {}]
  %s5 = inlined_call_operand.hbm [shape: f32[1,8], index: 5, kind: output, shape index: {}]
  %s6 = sld [smem:[#allocation0]]
  $region38: #{tpu_custom_call.1} parent=0
    _
  %s8 = ssub.s32 1, %s6
  %s9 = scalar_select 0, %s8, %s6
  %10 = sst [smem:[#allocation2]] %s4
  $region1: #{tpu_custom_call.1} parent=0
    #allocation3 [shape = 'u8[4096]{0}', space=vmem, size = 0x1000, scoped, tag = 'input window, operand 0, single buffered']
    #allocation4 [shape = 's32[1]{0}', space=sflag, size = 0x4, scoped, tag = 'scoped memory for tpu_custom_call.1']
    #allocation5 [shape = 's32[1]{0}', space=sflag, size = 0x4, scoped, tag = 'scoped memory for tpu_custom_call.1']
    #allocation6 [shape = 'u8[8192]{0}', space=vmem, size = 0x2000, scoped, tag = 'input window, operand 1, single buffered']
    #allocation7 [shape = 's32[1]{0}', space=sflag, size = 0x4, scoped, tag = 'scoped memory for tpu_custom_call.1']
    #allocation8 [shape = 'u8[512]{0}', space=vmem, size = 0x400, scoped, tag = 'output window, operand 0, single buffered']
    %11 = vsyncpa [#allocation4], 0
    %12 = vsyncpa [#allocation7], 0
    %13 = vsyncpa [#allocation5], 0
    // Predicated region
    $region2: #{tpu_custom_call.1} parent=1 // pred_check
      _
    $region3: #{tpu_custom_call.1} parent=1 // pred_check_branch
      %15 = sbr.rel (0) target = $region5
    $region4: #{tpu_custom_call.1} parent=1 // pred_region
      %17 = vsyncadd [#allocation4], 0
      %s19 = sshll.u32 %s0, 4
      %s20 = int_to_ptr.hbm [resolvable:$true] %s19
      %s21 = sshll.u32 [#allocation3], 4
      %s22 = int_to_ptr.vmem [resolvable:$true] %s21
      %24 = dma.hbm_to_vmem [thread:$0]  %s20, 128, %s22, [#allocation4]
    $region5: #{tpu_custom_call.1} parent=1 // pred_fallthru
      _
    // Predicated region
    $region6: #{tpu_custom_call.1} parent=1 // pred_check
      _
    $region7: #{tpu_custom_call.1} parent=1 // pred_check_branch
      %26 = sbr.rel (0) target = $region9
    $region8: #{tpu_custom_call.1} parent=1 // pred_region
      %28 = vsyncadd [#allocation7], 0
      %s29 = sshll.u32 %s1, 4
      %s30 = int_to_ptr.hbm [resolvable:$true] %s29
      %s31 = sshll.u32 [#allocation6], 4
      %s32 = int_to_ptr.vmem [resolvable:$true] %s31
      %37 = dma.hbm_to_vmem [thread:$0]  %s30, 256, %s32, [#allocation7], 128, 128, 8
    $region9: #{tpu_custom_call.1} parent=1 // pred_fallthru
      _
    // Predicated region
    $region10: #{tpu_custom_call.1} parent=1 // pred_check
      _
    $region11: #{tpu_custom_call.1} parent=1 // pred_check_branch
      %39 = sbr.rel (0) target = $region13
    $region12: #{tpu_custom_call.1} parent=1 // pred_region
      _
    $region13: #{tpu_custom_call.1} parent=1 // pred_fallthru
      _
    // Predicated region
    $region14: #{tpu_custom_call.1} parent=1 // pred_check
      _
    $region15: #{tpu_custom_call.1} parent=1 // pred_check_branch
      %41 = sbr.rel (0) target = $region17
    $region16: #{tpu_custom_call.1} parent=1 // pred_region
      _
    $region17: #{tpu_custom_call.1} parent=1 // pred_fallthru
      _
    // Predicated region
    $region18: #{tpu_custom_call.1} parent=1 // pred_check
      _
    $region19: #{tpu_custom_call.1} parent=1 // pred_check_branch
      %43 = sbr.rel (0) target = $region21
    $region20: #{tpu_custom_call.1} parent=1 // pred_region
      _
    $region21: #{tpu_custom_call.1} parent=1 // pred_fallthru
      _
    // Predicated region
    $region22: #{tpu_custom_call.1} parent=1 // pred_check
      _
    $region23: #{tpu_custom_call.1} parent=1 // pred_check_branch
      %45 = sbr.rel (0) target = $region25
    $region24: #{tpu_custom_call.1} parent=1 // pred_region
      %47 = dma.done [#allocation4], 128
    $region25: #{tpu_custom_call.1} parent=1 // pred_fallthru
      _
    // Predicated region
    $region26: #{tpu_custom_call.1} parent=1 // pred_check
      _
    $region27: #{tpu_custom_call.1} parent=1 // pred_check_branch
      %49 = sbr.rel (0) target = $region29
    $region28: #{tpu_custom_call.1} parent=1 // pred_region
      %51 = dma.done [#allocation7], 256
    $region29: #{tpu_custom_call.1} parent=1 // pred_fallthru
      _
    %v52 = vld [vmem:[#allocation3] sm:$0xff]
    %v53 = vld [vmem:[#allocation6] sm:$0xff]
    %v54 = vld [vmem:[#allocation6 + $0x8] sm:$0xff]
    %v55 = vld [vmem:[%s2] sm:$0x1]
    %v57 = vperm.slane %v55, 0
    %vm59 = vcmask 130048
    %v61 = vsel %vm59, %v52, 0
    %63 = vmatpush.msra.mxu0 0.0
    %64 = vmatpush.msra.mxu0 0.0
    %65 = vmatpush.msra.mxu0 0.0
    %66 = vmatpush.msra.mxu0 0.0
    %67 = vmatpush.msra.mxu0 0.0
    %68 = vmatpush.msra.mxu0 0.0
    %69 = vmatpush.msra.mxu0 0.0
    %70 = vmatpush.msra.mxu0 0.0
    %71 = vmatpush.msra.mxu0 0.0
    %72 = vmatpush.msra.mxu0 0.0
    %73 = vmatpush.msra.mxu0 0.0
    %74 = vmatpush.msra.mxu0 0.0
    %75 = vmatpush.msra.mxu0 0.0
    %76 = vmatpush.msra.mxu0 0.0
    %77 = vmatpush.msra.mxu0 %v54
    %78 = vmatpush.msra.mxu0 %v53
    %79 = vmatmul.f32.gmra.mxu0 %v61
    %v80 = vpop.f32.mrf.mxu0
    %v81 = vadd.f32 %v57, %v80
    %82 = vdwg.mxu0
    %v83 = vmax.f32 %v81, 0.0
    %v84 = vld [vmem:[%s3] sm:$0x1]
    %s85 = sld [smem:[#allocation2]]
    %v86 = vstv %s85
    %87 = vmatpush.xpose.msra.mxu0 0.0
    %88 = vmatpush.xpose.msra.mxu0 0.0
    %89 = vmatpush.xpose.msra.mxu0 0.0
    %90 = vmatpush.xpose.msra.mxu0 0.0
    %91 = vmatpush.xpose.msra.mxu0 0.0
    %92 = vmatpush.xpose.msra.mxu0 0.0
    %93 = vmatpush.xpose.msra.mxu0 0.0
    %94 = vmatpush.xpose.msra.mxu0 0.0
    %95 = vmatpush.xpose.msra.mxu0 0.0
    %96 = vmatpush.xpose.msra.mxu0 0.0
    %97 = vmatpush.xpose.msra.mxu0 0.0
    %98 = vmatpush.xpose.msra.mxu0 0.0
    %99 = vmatpush.xpose.msra.mxu0 0.0
    %100 = vmatpush.xpose.msra.mxu0 0.0
    %101 = vmatpush.xpose.msra.mxu0 0.0
    %102 = vmatpush.xpose.msra.mxu0 %v83
    %103 = vmatmul.f32.gmra.mxu0 %v84
    %v104 = vpop.f32.mrf.mxu0
    %v105 = vadd.f32 %v86, %v104
    %106 = vdwg.mxu0
    %vm107 = vcmask 57344
    %108 = vst.msk [vmem:[#allocation8] sm:$0x1] %vm107, %v105
    // Predicated region
    $region30: #{tpu_custom_call.1} parent=1 // pred_check
      _
    $region31: #{tpu_custom_call.1} parent=1 // pred_check_branch
      %110 = sbr.rel (0) target = $region33
    $region32: #{tpu_custom_call.1} parent=1 // pred_region
      %112 = vsyncadd [#allocation5], 0
      %s114 = sshll.u32 [#allocation8], 4
      %s115 = int_to_ptr.vmem [resolvable:$true] %s114
      %s116 = sshll.u32 %s5, 4
      %s117 = int_to_ptr.hbm [resolvable:$true] %s116
      %119 = dma.vmem_to_hbm [thread:$0]  %s115, 16, %s117, [#allocation5]
    $region33: #{tpu_custom_call.1} parent=1 // pred_fallthru
      _
    // Predicated region
    $region34: #{tpu_custom_call.1} parent=1 // pred_check
      _
    $region35: #{tpu_custom_call.1} parent=1 // pred_check_branch
      %121 = sbr.rel (0) target = $region37
    $region36: #{tpu_custom_call.1} parent=1 // pred_region
      %123 = dma.done [#allocation5], 16
    $region37: #{tpu_custom_call.1} parent=1 // pred_fallthru
      _
    %124 = vsyncpa [#allocation4], 1
    %125 = vsyncpa [#allocation7], 1
    %126 = vsyncpa [#allocation5], 1

</llo_original>
